<compile_context>
chip_gen: v6e
topology: v6e:2x2x1
jax: 0.10.0
libtpu: 0.0.40
codegen_flags: <defaults>
</compile_context>

<pallas_src>
import math

import jax
import jax.numpy as jnp
from jax.experimental import pallas as pl
from jax.experimental.pallas import tpu as pltpu


def _regressor_kernel(x_ref,
                      w1_ref, b1_ref,
                      w2_ref, b2_ref,
                      w3_ref, b3_ref,
                      w4_ref, b4_ref,
                      o_ref):
    """Fused MLP: 3 MXU matmuls + VPU/XLU final (N=1) layer.

    Matmul operands may be bf16 (v6e/v7x fast path); accumulation and all
    elementwise math (bias add, ReLU, final layer) stay in f32.
    """
    x = x_ref[...]

    h = jnp.dot(x, w1_ref[...], preferred_element_type=jnp.float32) + b1_ref[...]
    h = jnp.maximum(h, 0.0)
    # Dropout(p=0.1): identity in eval/inference mode.
    # TODO(synk): training-mode dropout would need pltpu.prng_seed/prng_random_bits masks.

    h = jnp.dot(h.astype(w2_ref.dtype), w2_ref[...],
                preferred_element_type=jnp.float32) + b2_ref[...]
    h = jnp.maximum(h, 0.0)

    h = jnp.dot(h.astype(w3_ref.dtype), w3_ref[...],
                preferred_element_type=jnp.float32) + b3_ref[...]
    h = jnp.maximum(h, 0.0)

    # Final Linear(d3 -> 1): an N=1 MXU matmul uses 1/128 (v5e) or 1/256
    # (v6e/v7x) of the MXU output width, so run it on the VPU (multiply) +
    # XLU (lane reduce), which sit idle while the MXU handles layers 1-3.
    # w4 is passed pre-reshaped as a (1, d3) f32 row.
    out = jnp.sum(h * w4_ref[...], axis=-1, keepdims=True) + b4_ref[...]
    o_ref[...] = out.astype(o_ref.dtype)


def _vmem_budget_bytes():
    """~75% of this chip's physical VMEM (v5e/v6e ~96 MiB, v7x ~48 MiB)."""
    try:
        cap = pltpu.get_tpu_info().vmem_capacity_bytes
    except Exception:
        cap = 64 * 1024 * 1024  # conservative fallback (v7x-sized)
    return int(cap) * 3 // 4


def _pick_tile_b(B, dim, vmem_budget):
    """Largest batch tile (multiple of 8, divides B) whose working set fits.

    Per grid step costs ~0.35 us of loop/DMA overhead, so bigger tiles are
    strictly better until VMEM runs out.
    """
    d1, d2, d3 = dim // 2, dim // 4, dim // 8
    # Single-buffered weights + biases (f32 upper bound).
    w_bytes = 4 * (dim * d1 + d1 * d2 + d2 * d3 + d3 + d1 + d2 + d3 + 1)
    # Per batch-row bytes: x tile (double-buffered) + live intermediates
    # + lane-padded output tile (double-buffered). f32 upper bound.
    per_row = 4 * (2 * dim + d1 + d2 + d3 + 2 * 128)
    headroom = vmem_budget - w_bytes - (1 << 20)
    t = max(8, min(1024, (headroom // per_row // 8) * 8))
    if B <= t:
        if B >= 1024 and B % 16 == 0:
            return B // 2  # >=2 grid steps so both v7x TensorCores get work
        return B           # whole batch in a single grid step
    for cand in range(t, 7, -8):
        if B % cand == 0:
            return cand
    return B               # ragged batch: fall back to one full-batch step


def regressor_forward(x, params, *, use_bf16=False, tile_b=None):
    """x: (B, dim) float32. params: list of (W, b) with W stored as (in, out).

    use_bf16: cast x and the three hidden-layer weights to bf16 at the
    pallas_call boundary (v6e/v7x MXU fast path, half the DMA bytes);
    accumulation, biases, ReLU and the final layer stay in f32.
    """
    B, dim = x.shape
    assert dim >= 8
    (w1, b1), (w2, b2), (w3, b3), (w4, b4) = params
    d1, d2, d3 = w1.shape[1], w2.shape[1], w3.shape[1]
    assert w4.shape == (d3, 1)

    vmem_budget = _vmem_budget_bytes()
    if tile_b is None:
        tile_b = _pick_tile_b(B, dim, vmem_budget)
    assert B % tile_b == 0, (B, tile_b)
    grid = (B // tile_b,)

    mm_dtype = jnp.bfloat16 if use_bf16 else x.dtype
    x_mm = x.astype(mm_dtype)
    w1m, w2m, w3m = (w.astype(mm_dtype) for w in (w1, w2, w3))
    # Final layer runs on the VPU in f32; pass w4 as a (1, d3) row.
    w4_row = w4.reshape(1, d3).astype(jnp.float32)
    b1f, b2f, b3f, b4f = (b.astype(jnp.float32) for b in (b1, b2, b3, b4))

    x_map = lambda i: (i, 0)
    const_map = lambda i: (0, 0)

    def wspec(shape):
        # Grid-invariant operands: single-buffer to avoid wasting VMEM on a
        # second (never used) pipeline buffer.
        return pl.BlockSpec(shape, const_map, pipeline_mode=pl.Buffered(1))

    out = pl.pallas_call(
        _regressor_kernel,
        out_shape=jax.ShapeDtypeStruct((B, 1), jnp.float32),
        grid_spec=pltpu.PrefetchScalarGridSpec(
            num_scalar_prefetch=0,
            grid=grid,
            in_specs=[
                pl.BlockSpec((tile_b, dim), x_map),
                wspec((dim, d1)), wspec((1, d1)),
                wspec((d1, d2)), wspec((1, d2)),
                wspec((d2, d3)), wspec((1, d3)),
                wspec((1, d3)), wspec((1, 1)),
            ],
            out_specs=pl.BlockSpec((tile_b, 1), x_map),
        ),
        compiler_params=pltpu.CompilerParams(
            dimension_semantics=("parallel",),
            vmem_limit_bytes=vmem_budget,
        ),
    )(x_mm, w1m, b1f, w2m, b2f, w3m, b3f, w4_row, b4f)
    return out


def init_regressor_params(key, dim):
    """Deterministic PyTorch-style init: U(-1/sqrt(fan_in), 1/sqrt(fan_in))."""
    sizes = [(dim, dim // 2), (dim // 2, dim // 4), (dim // 4, dim // 8), (dim // 8, 1)]
    params = []
    for (fan_in, fan_out) in sizes:
        key, kw, kb = jax.random.split(key, 3)
        bound = 1.0 / math.sqrt(fan_in)
        w = jax.random.uniform(kw, (fan_in, fan_out), jnp.float32, -bound, bound)
        b = jax.random.uniform(kb, (1, fan_out), jnp.float32, -bound, bound)
        params.append((w, b))
    return params


def regressor_reference(x, params):
    h = x
    for i, (w, b) in enumerate(params):
        h = h @ w + b
        if i < len(params) - 1:
            h = jnp.maximum(h, 0.0)
    return h


if __name__ == "__main__":
    dim = 128
    batch = 256

    key = jax.random.PRNGKey(0)
    kx, kp = jax.random.split(key)
    x = jax.random.normal(kx, (batch, dim), jnp.float32)
    params = init_regressor_params(kp, dim)

    ref = regressor_reference(x, params)

    # f32 path (strict check against the reference).
    out = jax.block_until_ready(regressor_forward(x, params))
    assert out.shape == (batch, 1)
    assert jnp.allclose(out, ref, atol=1e-5, rtol=1e-5), (
        f"f32 max err {jnp.max(jnp.abs(out - ref))}")

    # bf16 matmul-operand path (v6e/v7x MXU fast path), f32 accumulation;
    # validated against the f32 reference with relaxed tolerance.
    out_bf16 = jax.block_until_ready(regressor_forward(x, params, use_bf16=True))
    assert jnp.allclose(out_bf16, ref, atol=5e-2, rtol=5e-2), (
        f"bf16 max err {jnp.max(jnp.abs(out_bf16 - ref))}")

    print("KERNEL_OK")
</pallas_src>

<mosaic_0001>
module attributes {stable_mosaic.version = 11 : i64} {
  func.func @_regressor_kernel(%arg0: i32, %arg1: memref<256x128xf32, #tpu.memory_space<vmem>>, %arg2: memref<128x64xf32, #tpu.memory_space<vmem>>, %arg3: memref<1x64xf32, #tpu.memory_space<vmem>>, %arg4: memref<64x32xf32, #tpu.memory_space<vmem>>, %arg5: memref<1x32xf32, #tpu.memory_space<vmem>>, %arg6: memref<32x16xf32, #tpu.memory_space<vmem>>, %arg7: memref<1x16xf32, #tpu.memory_space<vmem>>, %arg8: memref<1x16xf32, #tpu.memory_space<vmem>>, %arg9: memref<1x1xf32, #tpu.memory_space<vmem>>, %arg10: memref<256x1xf32, #tpu.memory_space<vmem>>) attributes {dimension_semantics = [#tpu.dimension_semantics<parallel>], iteration_bounds = array<i64: 1>, scalar_prefetch = 0 : i64, scratch_operands = 0 : i64, tpu.core_type = #tpu.core_type<tc>, window_params = [{transform_indices = @transform_0, window_bounds = array<i64: 256, 128>}, {pipeline_mode = #tpu.pipeline_mode<synchronous>, transform_indices = @transform_1, window_bounds = array<i64: 128, 64>}, {pipeline_mode = #tpu.pipeline_mode<synchronous>, transform_indices = @transform_2, window_bounds = array<i64: 1, 64>}, {pipeline_mode = #tpu.pipeline_mode<synchronous>, transform_indices = @transform_3, window_bounds = array<i64: 64, 32>}, {pipeline_mode = #tpu.pipeline_mode<synchronous>, transform_indices = @transform_4, window_bounds = array<i64: 1, 32>}, {pipeline_mode = #tpu.pipeline_mode<synchronous>, transform_indices = @transform_5, window_bounds = array<i64: 32, 16>}, {pipeline_mode = #tpu.pipeline_mode<synchronous>, transform_indices = @transform_6, window_bounds = array<i64: 1, 16>}, {pipeline_mode = #tpu.pipeline_mode<synchronous>, transform_indices = @transform_7, window_bounds = array<i64: 1, 16>}, {pipeline_mode = #tpu.pipeline_mode<synchronous>, transform_indices = @transform_8, window_bounds = array<i64: 1, 1>}, {transform_indices = @transform_9, window_bounds = array<i64: 256, 1>}]} {
    %c0 = arith.constant 0 : index
    %c0_0 = arith.constant 0 : index
    %0 = vector.load %arg1[%c0, %c0_0] : memref<256x128xf32, #tpu.memory_space<vmem>>, vector<256x128xf32>
    %c0_1 = arith.constant 0 : index
    %c0_2 = arith.constant 0 : index
    %1 = vector.load %arg2[%c0_1, %c0_2] : memref<128x64xf32, #tpu.memory_space<vmem>>, vector<128x64xf32>
    %cst = arith.constant dense<0.000000e+00> : vector<256x64xf32>
    %2 = tpu.matmul %0, %1, %cst {dimension_numbers = #tpu.dot_dimension_numbers<[1], [0], [0], [1], [0, 0, 1, 1], [], []>} : vector<256x128xf32>, vector<128x64xf32>, vector<256x64xf32> -> vector<256x64xf32>
    %c0_3 = arith.constant 0 : index
    %c0_4 = arith.constant 0 : index
    %3 = vector.load %arg3[%c0_3, %c0_4] : memref<1x64xf32, #tpu.memory_space<vmem>>, vector<1x64xf32>
    %4 = vector.broadcast %3 : vector<1x64xf32> to vector<256x64xf32>
    %5 = arith.addf %2, %4 : vector<256x64xf32>
    %cst_5 = arith.constant 0.000000e+00 : f32
    %6 = vector.broadcast %cst_5 : f32 to vector<256x64xf32>
    %7 = arith.maximumf %5, %6 : vector<256x64xf32>
    %c0_6 = arith.constant 0 : index
    %c0_7 = arith.constant 0 : index
    %8 = vector.load %arg4[%c0_6, %c0_7] : memref<64x32xf32, #tpu.memory_space<vmem>>, vector<64x32xf32>
    %cst_8 = arith.constant dense<0.000000e+00> : vector<256x32xf32>
    %9 = tpu.matmul %7, %8, %cst_8 {dimension_numbers = #tpu.dot_dimension_numbers<[1], [0], [0], [1], [0, 0, 1, 1], [], []>} : vector<256x64xf32>, vector<64x32xf32>, vector<256x32xf32> -> vector<256x32xf32>
    %c0_9 = arith.constant 0 : index
    %c0_10 = arith.constant 0 : index
    %10 = vector.load %arg5[%c0_9, %c0_10] : memref<1x32xf32, #tpu.memory_space<vmem>>, vector<1x32xf32>
    %11 = vector.broadcast %10 : vector<1x32xf32> to vector<256x32xf32>
    %12 = arith.addf %9, %11 : vector<256x32xf32>
    %cst_11 = arith.constant 0.000000e+00 : f32
    %13 = vector.broadcast %cst_11 : f32 to vector<256x32xf32>
    %14 = arith.maximumf %12, %13 : vector<256x32xf32>
    %c0_12 = arith.constant 0 : index
    %c0_13 = arith.constant 0 : index
    %15 = vector.load %arg6[%c0_12, %c0_13] : memref<32x16xf32, #tpu.memory_space<vmem>>, vector<32x16xf32>
    %cst_14 = arith.constant dense<0.000000e+00> : vector<256x16xf32>
    %16 = tpu.matmul %14, %15, %cst_14 {dimension_numbers = #tpu.dot_dimension_numbers<[1], [0], [0], [1], [0, 0, 1, 1], [], []>} : vector<256x32xf32>, vector<32x16xf32>, vector<256x16xf32> -> vector<256x16xf32>
    %c0_15 = arith.constant 0 : index
    %c0_16 = arith.constant 0 : index
    %17 = vector.load %arg7[%c0_15, %c0_16] : memref<1x16xf32, #tpu.memory_space<vmem>>, vector<1x16xf32>
    %18 = vector.broadcast %17 : vector<1x16xf32> to vector<256x16xf32>
    %19 = arith.addf %16, %18 : vector<256x16xf32>
    %cst_17 = arith.constant 0.000000e+00 : f32
    %20 = vector.broadcast %cst_17 : f32 to vector<256x16xf32>
    %21 = arith.maximumf %19, %20 : vector<256x16xf32>
    %c0_18 = arith.constant 0 : index
    %c0_19 = arith.constant 0 : index
    %22 = vector.load %arg8[%c0_18, %c0_19] : memref<1x16xf32, #tpu.memory_space<vmem>>, vector<1x16xf32>
    %23 = vector.broadcast %22 : vector<1x16xf32> to vector<256x16xf32>
    %24 = arith.mulf %21, %23 : vector<256x16xf32>
    %cst_20 = arith.constant dense<0.000000e+00> : vector<256xf32>
    %25 = vector.multi_reduction <add>, %24, %cst_20 [1] : vector<256x16xf32> to vector<256xf32>
    %26 = vector.shape_cast %25 : vector<256xf32> to vector<256x1xf32>
    %c0_21 = arith.constant 0 : index
    %c0_22 = arith.constant 0 : index
    %27 = vector.load %arg9[%c0_21, %c0_22] : memref<1x1xf32, #tpu.memory_space<vmem>>, vector<1x1xf32>
    %28 = vector.broadcast %27 : vector<1x1xf32> to vector<256x1xf32>
    %29 = arith.addf %26, %28 : vector<256x1xf32>
    %c0_23 = arith.constant 0 : index
    %c0_24 = arith.constant 0 : index
    %30 = vector.load %arg10[%c0_23, %c0_24] : memref<256x1xf32, #tpu.memory_space<vmem>>, vector<256x1xf32>
    tpu.vector_store %arg10[%c0_23, %c0_24], %29 {strides = array<i32>} : memref<256x1xf32, #tpu.memory_space<vmem>>, vector<256x1xf32>,
    return
  }
  func.func @transform_0(%arg0: i32) -> (i32, i32) {
    %c0_i32 = arith.constant 0 : i32
    %c0_i32_0 = arith.constant 0 : i32
    return %arg0, %c0_i32 : i32, i32
  }
  func.func @transform_1(%arg0: i32) -> (i32, i32) {
    %c0_i32 = arith.constant 0 : i32
    %c0_i32_0 = arith.constant 0 : i32
    %c0_i32_1 = arith.constant 0 : i32
    return %c0_i32, %c0_i32_0 : i32, i32
  }
  func.func @transform_2(%arg0: i32) -> (i32, i32) {
    %c0_i32 = arith.constant 0 : i32
    %c0_i32_0 = arith.constant 0 : i32
    %c0_i32_1 = arith.constant 0 : i32
    return %c0_i32, %c0_i32_0 : i32, i32
  }
  func.func @transform_3(%arg0: i32) -> (i32, i32) {
    %c0_i32 = arith.constant 0 : i32
    %c0_i32_0 = arith.constant 0 : i32
    %c0_i32_1 = arith.constant 0 : i32
    return %c0_i32, %c0_i32_0 : i32, i32
  }
  func.func @transform_4(%arg0: i32) -> (i32, i32) {
    %c0_i32 = arith.constant 0 : i32
    %c0_i32_0 = arith.constant 0 : i32
    %c0_i32_1 = arith.constant 0 : i32
    return %c0_i32, %c0_i32_0 : i32, i32
  }
  func.func @transform_5(%arg0: i32) -> (i32, i32) {
    %c0_i32 = arith.constant 0 : i32
    %c0_i32_0 = arith.constant 0 : i32
    %c0_i32_1 = arith.constant 0 : i32
    return %c0_i32, %c0_i32_0 : i32, i32
  }
  func.func @transform_6(%arg0: i32) -> (i32, i32) {
    %c0_i32 = arith.constant 0 : i32
    %c0_i32_0 = arith.constant 0 : i32
    %c0_i32_1 = arith.constant 0 : i32
    return %c0_i32, %c0_i32_0 : i32, i32
  }
  func.func @transform_7(%arg0: i32) -> (i32, i32) {
    %c0_i32 = arith.constant 0 : i32
    %c0_i32_0 = arith.constant 0 : i32
    %c0_i32_1 = arith.constant 0 : i32
    return %c0_i32, %c0_i32_0 : i32, i32
  }
  func.func @transform_8(%arg0: i32) -> (i32, i32) {
    %c0_i32 = arith.constant 0 : i32
    %c0_i32_0 = arith.constant 0 : i32
    %c0_i32_1 = arith.constant 0 : i32
    return %c0_i32, %c0_i32_0 : i32, i32
  }
  func.func @transform_9(%arg0: i32) -> (i32, i32) {
    %c0_i32 = arith.constant 0 : i32
    %c0_i32_0 = arith.constant 0 : i32
    return %arg0, %c0_i32 : i32, i32
  }
}

</mosaic_0001>

<llo_original>
// kernel: tpu_custom_call.1
$region0: #{tpu_custom_call.1}
  #allocation0 [shape = 'u32[]', space=smem, size = 0x4, offset = 0x4, fixed_abs, tag = 'smem constant byte address 0x4 - core index']
  #allocation1 [shape = 'u32[144,128]{1,0:T(1,128)}', space=vmem, size = 0x12000, scoped, tag = 'internal scratch']
  #allocation2 [shape = 'f32[1,1]{1,0:T(1,128)S(1)}', space=vmem, size = 0x200, scoped, tag = 'scoped memory for tpu_custom_call.1']
  %s0 = inlined_call_operand.vmem [shape: f32[256,128], index: 0, kind: input, shape index: {}]
  %s1 = inlined_call_operand.vmem [shape: f32[128,64], index: 1, kind: input, shape index: {}]
  %s2 = inlined_call_operand.vmem [shape: f32[1,64], index: 2, kind: input, shape index: {}]
  %s3 = inlined_call_operand.vmem [shape: f32[64,32], index: 3, kind: input, shape index: {}]
  %s4 = inlined_call_operand.vmem [shape: f32[1,32], index: 4, kind: input, shape index: {}]
  %s5 = inlined_call_operand.vmem [shape: f32[32,16], index: 5, kind: input, shape index: {}]
  %s6 = inlined_call_operand.vmem [shape: f32[1,16], index: 6, kind: input, shape index: {}]
  %s7 = inlined_call_operand.vmem [shape: f32[1,16], index: 7, kind: input, shape index: {}]
  %s8 = inlined_call_operand.<no memory space> [shape: f32[1,1], index: 8, kind: input, shape index: {}]
  %s9 = inlined_call_operand.vmem [shape: f32[256,1], index: 9, kind: output, shape index: {}]
  %s10 = sld [smem:[#allocation0]]
  $region46: #{tpu_custom_call.1} parent=0
    _
  %s12 = ssub.s32 1, %s10
  %s13 = scalar_select 0, %s12, %s10
  %v14 = vstv %s8
  %15 = vst [vmem:[#allocation2] sm:$0x1] %v14
  // Predicated region
  $region2: #{tpu_custom_call.1} parent=0 // pred_check
    _
  $region3: #{tpu_custom_call.1} parent=0 // pred_check_branch
    %17 = sbr.rel (0) target = $region5
  $region4: #{tpu_custom_call.1} parent=0 // pred_region
    _
  $region5: #{tpu_custom_call.1} parent=0 // pred_fallthru
    _
  // Predicated region
  $region6: #{tpu_custom_call.1} parent=0 // pred_check
    _
  $region7: #{tpu_custom_call.1} parent=0 // pred_check_branch
    %19 = sbr.rel (0) target = $region9
  $region8: #{tpu_custom_call.1} parent=0 // pred_region
    _
  $region9: #{tpu_custom_call.1} parent=0 // pred_fallthru
    _
  // Predicated region
  $region10: #{tpu_custom_call.1} parent=0 // pred_check
    _
  $region11: #{tpu_custom_call.1} parent=0 // pred_check_branch
    %21 = sbr.rel (0) target = $region13
  $region12: #{tpu_custom_call.1} parent=0 // pred_region
    _
  $region13: #{tpu_custom_call.1} parent=0 // pred_fallthru
    _
  // Predicated region
  $region14: #{tpu_custom_call.1} parent=0 // pred_check
    _
  $region15: #{tpu_custom_call.1} parent=0 // pred_check_branch
    %23 = sbr.rel (0) target = $region17
  $region16: #{tpu_custom_call.1} parent=0 // pred_region
    _
  $region17: #{tpu_custom_call.1} parent=0 // pred_fallthru
    _
  // Predicated region
  $region18: #{tpu_custom_call.1} parent=0 // pred_check
    _
  $region19: #{tpu_custom_call.1} parent=0 // pred_check_branch
    %25 = sbr.rel (0) target = $region21
  $region20: #{tpu_custom_call.1} parent=0 // pred_region
    _
  $region21: #{tpu_custom_call.1} parent=0 // pred_fallthru
    _
  // Predicated region
  $region22: #{tpu_custom_call.1} parent=0 // pred_check
    _
  $region23: #{tpu_custom_call.1} parent=0 // pred_check_branch
    %27 = sbr.rel (0) target = $region25
  $region24: #{tpu_custom_call.1} parent=0 // pred_region
    _
  $region25: #{tpu_custom_call.1} parent=0 // pred_fallthru
    _
  // Predicated region
  $region26: #{tpu_custom_call.1} parent=0 // pred_check
    _
  $region27: #{tpu_custom_call.1} parent=0 // pred_check_branch
    %29 = sbr.rel (0) target = $region29
  $region28: #{tpu_custom_call.1} parent=0 // pred_region
    _
  $region29: #{tpu_custom_call.1} parent=0 // pred_fallthru
    _
  // Predicated region
  $region30: #{tpu_custom_call.1} parent=0 // pred_check
    _
  $region31: #{tpu_custom_call.1} parent=0 // pred_check_branch
    %31 = sbr.rel (0) target = $region33
  $region32: #{tpu_custom_call.1} parent=0 // pred_region
    _
  $region33: #{tpu_custom_call.1} parent=0 // pred_fallthru
    _
  // Predicated region
  $region34: #{tpu_custom_call.1} parent=0 // pred_check
    _
  $region35: #{tpu_custom_call.1} parent=0 // pred_check_branch
    %33 = sbr.rel (0) target = $region37
  $region36: #{tpu_custom_call.1} parent=0 // pred_region
    _
  $region37: #{tpu_custom_call.1} parent=0 // pred_fallthru
    _
  %v34 = vld [vmem:[%s0] sm:$0xff]
  %v35 = vld [vmem:[%s0 + $0x8] sm:$0xff]
  %v36 = vld [vmem:[%s0 + $0x10] sm:$0xff]
  %v37 = vld [vmem:[%s0 + $0x18] sm:$0xff]
  %v38 = vld [vmem:[%s0 + $0x20] sm:$0xff]
  %v39 = vld [vmem:[%s0 + $0x28] sm:$0xff]
  %v40 = vld [vmem:[%s0 + $0x30] sm:$0xff]
  %v41 = vld [vmem:[%s0 + $0x38] sm:$0xff]
  %v42 = vld [vmem:[%s0 + $0x40] sm:$0xff]
  %v43 = vld [vmem:[%s0 + $0x48] sm:$0xff]
  %v44 = vld [vmem:[%s0 + $0x50] sm:$0xff]
  %v45 = vld [vmem:[%s0 + $0x58] sm:$0xff]
  %v46 = vld [vmem:[%s0 + $0x60] sm:$0xff]
  %v47 = vld [vmem:[%s0 + $0x68] sm:$0xff]
  %v48 = vld [vmem:[%s0 + $0x70] sm:$0xff]
  %v49 = vld [vmem:[%s0 + $0x78] sm:$0xff]
  %v50 = vld [vmem:[%s0 + $0x80] sm:$0xff]
  %v51 = vld [vmem:[%s0 + $0x88] sm:$0xff]
  %v52 = vld [vmem:[%s0 + $0x90] sm:$0xff]
  %v53 = vld [vmem:[%s0 + $0x98] sm:$0xff]
  %v54 = vld [vmem:[%s0 + $0xa0] sm:$0xff]
  %v55 = vld [vmem:[%s0 + $0xa8] sm:$0xff]
  %v56 = vld [vmem:[%s0 + $0xb0] sm:$0xff]
  %v57 = vld [vmem:[%s0 + $0xb8] sm:$0xff]
  %v58 = vld [vmem:[%s0 + $0xc0] sm:$0xff]
  %v59 = vld [vmem:[%s0 + $0xc8] sm:$0xff]
  %v60 = vld [vmem:[%s0 + $0xd0] sm:$0xff]
  %v61 = vld [vmem:[%s0 + $0xd8] sm:$0xff]
  %v62 = vld [vmem:[%s0 + $0xe0] sm:$0xff]
  %v63 = vld [vmem:[%s0 + $0xe8] sm:$0xff]
  %v64 = vld [vmem:[%s0 + $0xf0] sm:$0xff]
  %v65 = vld [vmem:[%s0 + $0xf8] sm:$0xff]
  %v66 = vld [vmem:[%s1] sm:$0xff]
  %v67 = vld [vmem:[%s1 + $0x8] sm:$0xff]
  %v68 = vld [vmem:[%s1 + $0x10] sm:$0xff]
  %v69 = vld [vmem:[%s1 + $0x18] sm:$0xff]
  %v70 = vld [vmem:[%s1 + $0x20] sm:$0xff]
  %v71 = vld [vmem:[%s1 + $0x28] sm:$0xff]
  %v72 = vld [vmem:[%s1 + $0x30] sm:$0xff]
  %v73 = vld [vmem:[%s1 + $0x38] sm:$0xff]
  %v74 = vld [vmem:[%s1 + $0x40] sm:$0xff]
  %v75 = vld [vmem:[%s1 + $0x48] sm:$0xff]
  %v76 = vld [vmem:[%s1 + $0x50] sm:$0xff]
  %v77 = vld [vmem:[%s1 + $0x58] sm:$0xff]
  %v78 = vld [vmem:[%s1 + $0x60] sm:$0xff]
  %v79 = vld [vmem:[%s1 + $0x68] sm:$0xff]
  %v80 = vld [vmem:[%s1 + $0x70] sm:$0xff]
  %v81 = vld [vmem:[%s1 + $0x78] sm:$0xff]
  %v82 = vld [vmem:[%s2] sm:$0x1]
  %v84 = vlaneseq
  %v85 = vshrl.u32 %v84, 7
  %v86 = vsub.s32 0, %v85
  %v87 = vrot.slane %v82, %v86
  %89 = vmatprep.subr.mxu0 0.0
  %90 = vmatpush1.msra.mxu0 %v81
  %91 = vmatprep.subr.mxu0 0.0
  %92 = vmatpush1.msra.mxu0 %v80
  %93 = vmatprep.subr.mxu0 0.0
  %94 = vmatpush1.msra.mxu0 %v79
  %95 = vmatprep.subr.mxu0 0.0
  %96 = vmatpush1.msra.mxu0 %v78
  %97 = vmatprep.subr.mxu0 0.0
  %98 = vmatpush1.msra.mxu0 %v77
  %99 = vmatprep.subr.mxu0 0.0
  %100 = vmatpush1.msra.mxu0 %v76
  %101 = vmatprep.subr.mxu0 0.0
  %102 = vmatpush1.msra.mxu0 %v75
  %103 = vmatprep.subr.mxu0 0.0
  %104 = vmatpush1.msra.mxu0 %v74
  %105 = vmatprep.subr.mxu0 0.0
  %106 = vmatpush1.msra.mxu0 %v73
  %107 = vmatprep.subr.mxu0 0.0
  %108 = vmatpush1.msra.mxu0 %v72
  %109 = vmatprep.subr.mxu0 0.0
  %110 = vmatpush1.msra.mxu0 %v71
  %111 = vmatprep.subr.mxu0 0.0
  %112 = vmatpush1.msra.mxu0 %v70
  %113 = vmatprep.subr.mxu0 0.0
  %114 = vmatpush1.msra.mxu0 %v69
  %115 = vmatprep.subr.mxu0 0.0
  %116 = vmatpush1.msra.mxu0 %v68
  %117 = vmatprep.subr.mxu0 0.0
  %118 = vmatpush1.msra.mxu0 %v67
  %119 = vmatprep.subr.mxu0 0.0
  %120 = vmatpush1.msra.mxu0 %v66
  %121 = vmatprep.subr.mxu0 0.0
  %122 = vmatpush2.msra.mxu0 0.0
  %123 = vmatprep.subr.mxu0 0.0
  %124 = vmatpush2.msra.mxu0 0.0
  %125 = vmatprep.subr.mxu0 0.0
  %126 = vmatpush2.msra.mxu0 0.0
  %127 = vmatprep.subr.mxu0 0.0
  %128 = vmatpush2.msra.mxu0 0.0
  %129 = vmatprep.subr.mxu0 0.0
  %130 = vmatpush2.msra.mxu0 0.0
  %131 = vmatprep.subr.mxu0 0.0
  %132 = vmatpush2.msra.mxu0 0.0
  %133 = vmatprep.subr.mxu0 0.0
  %134 = vmatpush2.msra.mxu0 0.0
  %135 = vmatprep.subr.mxu0 0.0
  %136 = vmatpush2.msra.mxu0 0.0
  %137 = vmatprep.subr.mxu0 0.0
  %138 = vmatpush2.msra.mxu0 0.0
  %139 = vmatprep.subr.mxu0 0.0
  %140 = vmatpush2.msra.mxu0 0.0
  %141 = vmatprep.subr.mxu0 0.0
  %142 = vmatpush2.msra.mxu0 0.0
  %143 = vmatprep.subr.mxu0 0.0
  %144 = vmatpush2.msra.mxu0 0.0
  %145 = vmatprep.subr.mxu0 0.0
  %146 = vmatpush2.msra.mxu0 0.0
  %147 = vmatprep.subr.mxu0 0.0
  %148 = vmatpush2.msra.mxu0 0.0
  %149 = vmatprep.subr.mxu0 0.0
  %150 = vmatpush2.msra.mxu0 0.0
  %151 = vmatprep.subr.mxu0 0.0
  %152 = vmatpush2.msra.mxu0 0.0
  %153 = vmatprep.mubr.f32.mxu0 0.0
  %154 = vmatmul.mubr.f32.gmra.mxu0 %v34
  %v155 = vpop.f32.mrf.mxu0
  %v156 = vadd.f32 %v87, %v155
  %v157 = vpop.f32.mrf.mxu0
  %158 = vmatprep.mubr.f32.mxu0 0.0
  %159 = vmatmul.mubr.f32.gmra.mxu0 %v35
  %v160 = vpop.f32.mrf.mxu0
  %v161 = vadd.f32 %v87, %v160
  %v162 = vpop.f32.mrf.mxu0
  %163 = vmatprep.mubr.f32.mxu0 0.0
  %164 = vmatmul.mubr.f32.gmra.mxu0 %v36
  %v165 = vpop.f32.mrf.mxu0
  %v166 = vadd.f32 %v87, %v165
  %v167 = vpop.f32.mrf.mxu0
  %168 = vmatprep.mubr.f32.mxu0 0.0
  %169 = vmatmul.mubr.f32.gmra.mxu0 %v37
  %v170 = vpop.f32.mrf.mxu0
  %v171 = vadd.f32 %v87, %v170
  %v172 = vpop.f32.mrf.mxu0
  %173 = vmatprep.mubr.f32.mxu0 0.0
  %174 = vmatmul.mubr.f32.gmra.mxu0 %v38
  %v175 = vpop.f32.mrf.mxu0
  %v176 = vadd.f32 %v87, %v175
  %v177 = vpop.f32.mrf.mxu0
  %178 = vmatprep.mubr.f32.mxu0 0.0
  %179 = vmatmul.mubr.f32.gmra.mxu0 %v39
  %v180 = vpop.f32.mrf.mxu0
  %v181 = vadd.f32 %v87, %v180
  %v182 = vpop.f32.mrf.mxu0
  %183 = vmatprep.mubr.f32.mxu0 0.0
  %184 = vmatmul.mubr.f32.gmra.mxu0 %v40
  %v185 = vpop.f32.mrf.mxu0
  %v186 = vadd.f32 %v87, %v185
  %v187 = vpop.f32.mrf.mxu0
  %188 = vmatprep.mubr.f32.mxu0 0.0
  %189 = vmatmul.mubr.f32.gmra.mxu0 %v41
  %v190 = vpop.f32.mrf.mxu0
  %v191 = vadd.f32 %v87, %v190
  %v192 = vpop.f32.mrf.mxu0
  %193 = vmatprep.mubr.f32.mxu0 0.0
  %194 = vmatmul.mubr.f32.gmra.mxu0 %v42
  %v195 = vpop.f32.mrf.mxu0
  %v196 = vadd.f32 %v87, %v195
  %v197 = vpop.f32.mrf.mxu0
  %198 = vmatprep.mubr.f32.mxu0 0.0
  %199 = vmatmul.mubr.f32.gmra.mxu0 %v43
  %v200 = vpop.f32.mrf.mxu0
  %v201 = vadd.f32 %v87, %v200
  %v202 = vpop.f32.mrf.mxu0
  %203 = vmatprep.mubr.f32.mxu0 0.0
  %204 = vmatmul.mubr.f32.gmra.mxu0 %v44
  %v205 = vpop.f32.mrf.mxu0
  %v206 = vadd.f32 %v87, %v205
  %v207 = vpop.f32.mrf.mxu0
  %208 = vmatprep.mubr.f32.mxu0 0.0
  %209 = vmatmul.mubr.f32.gmra.mxu0 %v45
  %v210 = vpop.f32.mrf.mxu0
  %v211 = vadd.f32 %v87, %v210
  %v212 = vpop.f32.mrf.mxu0
  %213 = vmatprep.mubr.f32.mxu0 0.0
  %214 = vmatmul.mubr.f32.gmra.mxu0 %v46
  %v215 = vpop.f32.mrf.mxu0
  %v216 = vadd.f32 %v87, %v215
  %v217 = vpop.f32.mrf.mxu0
  %218 = vmatprep.mubr.f32.mxu0 0.0
  %219 = vmatmul.mubr.f32.gmra.mxu0 %v47
  %v220 = vpop.f32.mrf.mxu0
  %v221 = vadd.f32 %v87, %v220
  %v222 = vpop.f32.mrf.mxu0
  %223 = vmatprep.mubr.f32.mxu0 0.0
  %224 = vmatmul.mubr.f32.gmra.mxu0 %v48
  %v225 = vpop.f32.mrf.mxu0
  %v226 = vadd.f32 %v87, %v225
  %v227 = vpop.f32.mrf.mxu0
  %228 = vmatprep.mubr.f32.mxu0 0.0
  %229 = vmatmul.mubr.f32.gmra.mxu0 %v49
  %v230 = vpop.f32.mrf.mxu0
  %v231 = vadd.f32 %v87, %v230
  %v232 = vpop.f32.mrf.mxu0
  %233 = vmatprep.mubr.f32.mxu0 0.0
  %234 = vmatmul.mubr.f32.gmra.mxu0 %v50
  %v235 = vpop.f32.mrf.mxu0
  %v236 = vadd.f32 %v87, %v235
  %v237 = vpop.f32.mrf.mxu0
  %238 = vmatprep.mubr.f32.mxu0 0.0
  %239 = vmatmul.mubr.f32.gmra.mxu0 %v51
  %v240 = vpop.f32.mrf.mxu0
  %v241 = vadd.f32 %v87, %v240
  %v242 = vpop.f32.mrf.mxu0
  %243 = vmatprep.mubr.f32.mxu0 0.0
  %244 = vmatmul.mubr.f32.gmra.mxu0 %v52
  %v245 = vpop.f32.mrf.mxu0
  %v246 = vadd.f32 %v87, %v245
  %v247 = vpop.f32.mrf.mxu0
  %248 = vmatprep.mubr.f32.mxu0 0.0
  %249 = vmatmul.mubr.f32.gmra.mxu0 %v53
  %v250 = vpop.f32.mrf.mxu0
  %v251 = vadd.f32 %v87, %v250
  %v252 = vpop.f32.mrf.mxu0
  %253 = vmatprep.mubr.f32.mxu0 0.0
  %254 = vmatmul.mubr.f32.gmra.mxu0 %v54
  %v255 = vpop.f32.mrf.mxu0
  %v256 = vadd.f32 %v87, %v255
  %v257 = vpop.f32.mrf.mxu0
  %258 = vmatprep.mubr.f32.mxu0 0.0
  %259 = vmatmul.mubr.f32.gmra.mxu0 %v55
  %v260 = vpop.f32.mrf.mxu0
  %v261 = vadd.f32 %v87, %v260
  %v262 = vpop.f32.mrf.mxu0
  %263 = vmatprep.mubr.f32.mxu0 0.0
  %264 = vmatmul.mubr.f32.gmra.mxu0 %v56
  %v265 = vpop.f32.mrf.mxu0
  %v266 = vadd.f32 %v87, %v265
  %v267 = vpop.f32.mrf.mxu0
  %268 = vmatprep.mubr.f32.mxu0 0.0
  %269 = vmatmul.mubr.f32.gmra.mxu0 %v57
  %v270 = vpop.f32.mrf.mxu0
  %v271 = vadd.f32 %v87, %v270
  %v272 = vpop.f32.mrf.mxu0
  %273 = vmatprep.mubr.f32.mxu0 0.0
  %274 = vmatmul.mubr.f32.gmra.mxu0 %v58
  %v275 = vpop.f32.mrf.mxu0
  %v276 = vadd.f32 %v87, %v275
  %v277 = vpop.f32.mrf.mxu0
  %278 = vmatprep.mubr.f32.mxu0 0.0
  %279 = vmatmul.mubr.f32.gmra.mxu0 %v59
  %v280 = vpop.f32.mrf.mxu0
  %v281 = vadd.f32 %v87, %v280
  %v282 = vpop.f32.mrf.mxu0
  %283 = vmatprep.mubr.f32.mxu0 0.0
  %284 = vmatmul.mubr.f32.gmra.mxu0 %v60
  %v285 = vpop.f32.mrf.mxu0
  %v286 = vadd.f32 %v87, %v285
  %v287 = vpop.f32.mrf.mxu0
  %288 = vmatprep.mubr.f32.mxu0 0.0
  %289 = vmatmul.mubr.f32.gmra.mxu0 %v61
  %v290 = vpop.f32.mrf.mxu0
  %v291 = vadd.f32 %v87, %v290
  %v292 = vpop.f32.mrf.mxu0
  %293 = vmatprep.mubr.f32.mxu0 0.0
  %294 = vmatmul.mubr.f32.gmra.mxu0 %v62
  %v295 = vpop.f32.mrf.mxu0
  %v296 = vadd.f32 %v87, %v295
  %v297 = vpop.f32.mrf.mxu0
  %298 = vmatprep.mubr.f32.mxu0 0.0
  %299 = vmatmul.mubr.f32.gmra.mxu0 %v63
  %v300 = vpop.f32.mrf.mxu0
  %v301 = vadd.f32 %v87, %v300
  %v302 = vpop.f32.mrf.mxu0
  %303 = vmatprep.mubr.f32.mxu0 0.0
  %304 = vmatmul.mubr.f32.gmra.mxu0 %v64
  %v305 = vpop.f32.mrf.mxu0
  %v306 = vadd.f32 %v87, %v305
  %v307 = vpop.f32.mrf.mxu0
  %308 = vmatprep.mubr.f32.mxu0 0.0
  %309 = vmatmul.mubr.f32.gmra.mxu0 %v65
  %v310 = vpop.f32.mrf.mxu0
  %v311 = vadd.f32 %v87, %v310
  %v312 = vpop.f32.mrf.mxu0
  %313 = vdwg.mxu0
  %v314 = vmax.f32 %v156, 0.0
  %v315 = vmax.f32 %v161, 0.0
  %v316 = vmax.f32 %v166, 0.0
  %v317 = vmax.f32 %v171, 0.0
  %v318 = vmax.f32 %v176, 0.0
  %v319 = vmax.f32 %v181, 0.0
  %v320 = vmax.f32 %v186, 0.0
  %v321 = vmax.f32 %v191, 0.0
  %v322 = vmax.f32 %v196, 0.0
  %v323 = vmax.f32 %v201, 0.0
  %v324 = vmax.f32 %v206, 0.0
  %v325 = vmax.f32 %v211, 0.0
  %v326 = vmax.f32 %v216, 0.0
  %v327 = vmax.f32 %v221, 0.0
  %v328 = vmax.f32 %v226, 0.0
  %v329 = vmax.f32 %v231, 0.0
  %v330 = vmax.f32 %v236, 0.0
  %v331 = vmax.f32 %v241, 0.0
  %v332 = vmax.f32 %v246, 0.0
  %v333 = vmax.f32 %v251, 0.0
  %v334 = vmax.f32 %v256, 0.0
  %v335 = vmax.f32 %v261, 0.0
  %v336 = vmax.f32 %v266, 0.0
  %v337 = vmax.f32 %v271, 0.0
  %v338 = vmax.f32 %v276, 0.0
  %v339 = vmax.f32 %v281, 0.0
  %v340 = vmax.f32 %v286, 0.0
  %v341 = vmax.f32 %v291, 0.0
  %v342 = vmax.f32 %v296, 0.0
  %v343 = vmax.f32 %v301, 0.0
  %v344 = vmax.f32 %v306, 0.0
  %v345 = vmax.f32 %v311, 0.0
  %v346 = vld [vmem:[%s3] sm:$0xff]
  %v347 = vld [vmem:[%s3 + $0x8] sm:$0xff]
  %v348 = vld [vmem:[%s3 + $0x10] sm:$0xff]
  %v349 = vld [vmem:[%s3 + $0x18] sm:$0xff]
  %v350 = vld [vmem:[%s3 + $0x20] sm:$0xff]
  %v351 = vld [vmem:[%s3 + $0x28] sm:$0xff]
  %v352 = vld [vmem:[%s3 + $0x30] sm:$0xff]
  %v353 = vld [vmem:[%s3 + $0x38] sm:$0xff]
  %v354 = vld [vmem:[%s4] sm:$0x1]
  %v356 = vlaneseq
  %v357 = vshrl.u32 %v356, 7
  %v358 = vsub.s32 0, %v357
  %v359 = vrot.slane %v354, %v358
  %vm361 = vcmask 523264
  %v363 = vsel %vm361, %v314, 0
  %v366 = vsel %vm361, %v315, 0
  %v369 = vsel %vm361, %v316, 0
  %v372 = vsel %vm361, %v317, 0
  %v375 = vsel %vm361, %v318, 0
  %v378 = vsel %vm361, %v319, 0
  %v381 = vsel %vm361, %v320, 0
  %v384 = vsel %vm361, %v321, 0
  %v387 = vsel %vm361, %v322, 0
  %v390 = vsel %vm361, %v323, 0
  %v393 = vsel %vm361, %v324, 0
  %v396 = vsel %vm361, %v325, 0
  %v399 = vsel %vm361, %v326, 0
  %v402 = vsel %vm361, %v327, 0
  %v405 = vsel %vm361, %v328, 0
  %v408 = vsel %vm361, %v329, 0
  %v411 = vsel %vm361, %v330, 0
  %v414 = vsel %vm361, %v331, 0
  %v417 = vsel %vm361, %v332, 0
  %v420 = vsel %vm361, %v333, 0
  %v423 = vsel %vm361, %v334, 0
  %v426 = vsel %vm361, %v335, 0
  %v429 = vsel %vm361, %v336, 0
  %v432 = vsel %vm361, %v337, 0
  %v435 = vsel %vm361, %v338, 0
  %v438 = vsel %vm361, %v339, 0
  %v441 = vsel %vm361, %v340, 0
  %v444 = vsel %vm361, %v341, 0
  %v447 = vsel %vm361, %v342, 0
  %v450 = vsel %vm361, %v343, 0
  %v453 = vsel %vm361, %v344, 0
  %v456 = vsel %vm361, %v345, 0
  %458 = vmatprep.subr.mxu0 0.0
  %459 = vmatpush1.msra.mxu0 0.0
  %460 = vmatprep.subr.mxu0 0.0
  %461 = vmatpush1.msra.mxu0 0.0
  %462 = vmatprep.subr.mxu0 0.0
  %463 = vmatpush1.msra.mxu0 0.0
  %464 = vmatprep.subr.mxu0 0.0
  %465 = vmatpush1.msra.mxu0 0.0
  %466 = vmatprep.subr.mxu0 0.0
  %467 = vmatpush1.msra.mxu0 0.0
  %468 = vmatprep.subr.mxu0 0.0
  %469 = vmatpush1.msra.mxu0 0.0
  %470 = vmatprep.subr.mxu0 0.0
  %471 = vmatpush1.msra.mxu0 0.0
  %472 = vmatprep.subr.mxu0 0.0
  %473 = vmatpush1.msra.mxu0 0.0
  %474 = vmatprep.subr.mxu0 0.0
  %475 = vmatpush1.msra.mxu0 %v353
  %476 = vmatprep.subr.mxu0 0.0
  %477 = vmatpush1.msra.mxu0 %v352
  %478 = vmatprep.subr.mxu0 0.0
  %479 = vmatpush1.msra.mxu0 %v351
  %480 = vmatprep.subr.mxu0 0.0
  %481 = vmatpush1.msra.mxu0 %v350
  %482 = vmatprep.subr.mxu0 0.0
  %483 = vmatpush1.msra.mxu0 %v349
  %484 = vmatprep.subr.mxu0 0.0
  %485 = vmatpush1.msra.mxu0 %v348
  %486 = vmatprep.subr.mxu0 0.0
  %487 = vmatpush1.msra.mxu0 %v347
  %488 = vmatprep.subr.mxu0 0.0
  %489 = vmatpush1.msra.mxu0 %v346
  %490 = vmatprep.subr.mxu0 0.0
  %491 = vmatpush2.msra.mxu0 0.0
  %492 = vmatprep.subr.mxu0 0.0
  %493 = vmatpush2.msra.mxu0 0.0
  %494 = vmatprep.subr.mxu0 0.0
  %495 = vmatpush2.msra.mxu0 0.0
  %496 = vmatprep.subr.mxu0 0.0
  %497 = vmatpush2.msra.mxu0 0.0
  %498 = vmatprep.subr.mxu0 0.0
  %499 = vmatpush2.msra.mxu0 0.0
  %500 = vmatprep.subr.mxu0 0.0
  %501 = vmatpush2.msra.mxu0 0.0
  %502 = vmatprep.subr.mxu0 0.0
  %503 = vmatpush2.msra.mxu0 0.0
  %504 = vmatprep.subr.mxu0 0.0
  %505 = vmatpush2.msra.mxu0 0.0
  %506 = vmatprep.subr.mxu0 0.0
  %507 = vmatpush2.msra.mxu0 0.0
  %508 = vmatprep.subr.mxu0 0.0
  %509 = vmatpush2.msra.mxu0 0.0
  %510 = vmatprep.subr.mxu0 0.0
  %511 = vmatpush2.msra.mxu0 0.0
  %512 = vmatprep.subr.mxu0 0.0
  %513 = vmatpush2.msra.mxu0 0.0
  %514 = vmatprep.subr.mxu0 0.0
  %515 = vmatpush2.msra.mxu0 0.0
  %516 = vmatprep.subr.mxu0 0.0
  %517 = vmatpush2.msra.mxu0 0.0
  %518 = vmatprep.subr.mxu0 0.0
  %519 = vmatpush2.msra.mxu0 0.0
  %520 = vmatprep.subr.mxu0 0.0
  %521 = vmatpush2.msra.mxu0 0.0
  %522 = vmatprep.mubr.f32.mxu0 0.0
  %523 = vmatmul.mubr.f32.gmra.mxu0 %v363
  %v524 = vpop.f32.mrf.mxu0
  %v525 = vadd.f32 %v359, %v524
  %v526 = vpop.f32.mrf.mxu0
  %527 = vmatprep.mubr.f32.mxu0 0.0
  %528 = vmatmul.mubr.f32.gmra.mxu0 %v366
  %v529 = vpop.f32.mrf.mxu0
  %v530 = vadd.f32 %v359, %v529
  %v531 = vpop.f32.mrf.mxu0
  %532 = vmatprep.mubr.f32.mxu0 0.0
  %533 = vmatmul.mubr.f32.gmra.mxu0 %v369
  %v534 = vpop.f32.mrf.mxu0
  %v535 = vadd.f32 %v359, %v534
  %v536 = vpop.f32.mrf.mxu0
  %537 = vmatprep.mubr.f32.mxu0 0.0
  %538 = vmatmul.mubr.f32.gmra.mxu0 %v372
  %v539 = vpop.f32.mrf.mxu0
  %v540 = vadd.f32 %v359, %v539
  %v541 = vpop.f32.mrf.mxu0
  %542 = vmatprep.mubr.f32.mxu0 0.0
  %543 = vmatmul.mubr.f32.gmra.mxu0 %v375
  %v544 = vpop.f32.mrf.mxu0
  %v545 = vadd.f32 %v359, %v544
  %v546 = vpop.f32.mrf.mxu0
  %547 = vmatprep.mubr.f32.mxu0 0.0
  %548 = vmatmul.mubr.f32.gmra.mxu0 %v378
  %v549 = vpop.f32.mrf.mxu0
  %v550 = vadd.f32 %v359, %v549
  %v551 = vpop.f32.mrf.mxu0
  %552 = vmatprep.mubr.f32.mxu0 0.0
  %553 = vmatmul.mubr.f32.gmra.mxu0 %v381
  %v554 = vpop.f32.mrf.mxu0
  %v555 = vadd.f32 %v359, %v554
  %v556 = vpop.f32.mrf.mxu0
  %557 = vmatprep.mubr.f32.mxu0 0.0
  %558 = vmatmul.mubr.f32.gmra.mxu0 %v384
  %v559 = vpop.f32.mrf.mxu0
  %v560 = vadd.f32 %v359, %v559
  %v561 = vpop.f32.mrf.mxu0
  %562 = vmatprep.mubr.f32.mxu0 0.0
  %563 = vmatmul.mubr.f32.gmra.mxu0 %v387
  %v564 = vpop.f32.mrf.mxu0
  %v565 = vadd.f32 %v359, %v564
  %v566 = vpop.f32.mrf.mxu0
  %567 = vmatprep.mubr.f32.mxu0 0.0
  %568 = vmatmul.mubr.f32.gmra.mxu0 %v390
  %v569 = vpop.f32.mrf.mxu0
  %v570 = vadd.f32 %v359, %v569
  %v571 = vpop.f32.mrf.mxu0
  %572 = vmatprep.mubr.f32.mxu0 0.0
  %573 = vmatmul.mubr.f32.gmra.mxu0 %v393
  %v574 = vpop.f32.mrf.mxu0
  %v575 = vadd.f32 %v359, %v574
  %v576 = vpop.f32.mrf.mxu0
  %577 = vmatprep.mubr.f32.mxu0 0.0
  %578 = vmatmul.mubr.f32.gmra.mxu0 %v396
  %v579 = vpop.f32.mrf.mxu0
  %v580 = vadd.f32 %v359, %v579
  %v581 = vpop.f32.mrf.mxu0
  %582 = vmatprep.mubr.f32.mxu0 0.0
  %583 = vmatmul.mubr.f32.gmra.mxu0 %v399
  %v584 = vpop.f32.mrf.mxu0
  %v585 = vadd.f32 %v359, %v584
  %v586 = vpop.f32.mrf.mxu0
  %587 = vmatprep.mubr.f32.mxu0 0.0
  %588 = vmatmul.mubr.f32.gmra.mxu0 %v402
  %v589 = vpop.f32.mrf.mxu0
  %v590 = vadd.f32 %v359, %v589
  %v591 = vpop.f32.mrf.mxu0
  %592 = vmatprep.mubr.f32.mxu0 0.0
  %593 = vmatmul.mubr.f32.gmra.mxu0 %v405
  %v594 = vpop.f32.mrf.mxu0
  %v595 = vadd.f32 %v359, %v594
  %v596 = vpop.f32.mrf.mxu0
  %597 = vmatprep.mubr.f32.mxu0 0.0
  %598 = vmatmul.mubr.f32.gmra.mxu0 %v408
  %v599 = vpop.f32.mrf.mxu0
  %v600 = vadd.f32 %v359, %v599
  %v601 = vpop.f32.mrf.mxu0
  %602 = vmatprep.mubr.f32.mxu0 0.0
  %603 = vmatmul.mubr.f32.gmra.mxu0 %v411
  %v604 = vpop.f32.mrf.mxu0
  %v605 = vadd.f32 %v359, %v604
  %v606 = vpop.f32.mrf.mxu0
  %607 = vmatprep.mubr.f32.mxu0 0.0
  %608 = vmatmul.mubr.f32.gmra.mxu0 %v414
  %v609 = vpop.f32.mrf.mxu0
  %v610 = vadd.f32 %v359, %v609
  %v611 = vpop.f32.mrf.mxu0
  %612 = vmatprep.mubr.f32.mxu0 0.0
  %613 = vmatmul.mubr.f32.gmra.mxu0 %v417
  %v614 = vpop.f32.mrf.mxu0
  %v615 = vadd.f32 %v359, %v614
  %v616 = vpop.f32.mrf.mxu0
  %617 = vmatprep.mubr.f32.mxu0 0.0
  %618 = vmatmul.mubr.f32.gmra.mxu0 %v420
  %v619 = vpop.f32.mrf.mxu0
  %v620 = vadd.f32 %v359, %v619
  %v621 = vpop.f32.mrf.mxu0
  %622 = vmatprep.mubr.f32.mxu0 0.0
  %623 = vmatmul.mubr.f32.gmra.mxu0 %v423
  %v624 = vpop.f32.mrf.mxu0
  %v625 = vadd.f32 %v359, %v624
  %v626 = vpop.f32.mrf.mxu0
  %627 = vmatprep.mubr.f32.mxu0 0.0
  %628 = vmatmul.mubr.f32.gmra.mxu0 %v426
  %v629 = vpop.f32.mrf.mxu0
  %v630 = vadd.f32 %v359, %v629
  %v631 = vpop.f32.mrf.mxu0
  %632 = vmatprep.mubr.f32.mxu0 0.0
  %633 = vmatmul.mubr.f32.gmra.mxu0 %v429
  %v634 = vpop.f32.mrf.mxu0
  %v635 = vadd.f32 %v359, %v634
  %v636 = vpop.f32.mrf.mxu0
  %637 = vmatprep.mubr.f32.mxu0 0.0
  %638 = vmatmul.mubr.f32.gmra.mxu0 %v432
  %v639 = vpop.f32.mrf.mxu0
  %v640 = vadd.f32 %v359, %v639
  %v641 = vpop.f32.mrf.mxu0
  %642 = vmatprep.mubr.f32.mxu0 0.0
  %643 = vmatmul.mubr.f32.gmra.mxu0 %v435
  %v644 = vpop.f32.mrf.mxu0
  %v645 = vadd.f32 %v359, %v644
  %v646 = vpop.f32.mrf.mxu0
  %647 = vmatprep.mubr.f32.mxu0 0.0
  %648 = vmatmul.mubr.f32.gmra.mxu0 %v438
  %v649 = vpop.f32.mrf.mxu0
  %v650 = vadd.f32 %v359, %v649
  %v651 = vpop.f32.mrf.mxu0
  %652 = vmatprep.mubr.f32.mxu0 0.0
  %653 = vmatmul.mubr.f32.gmra.mxu0 %v441
  %v654 = vpop.f32.mrf.mxu0
  %v655 = vadd.f32 %v359, %v654
  %v656 = vpop.f32.mrf.mxu0
  %657 = vmatprep.mubr.f32.mxu0 0.0
  %658 = vmatmul.mubr.f32.gmra.mxu0 %v444
  %v659 = vpop.f32.mrf.mxu0
  %v660 = vadd.f32 %v359, %v659
  %v661 = vpop.f32.mrf.mxu0
  %662 = vmatprep.mubr.f32.mxu0 0.0
  %663 = vmatmul.mubr.f32.gmra.mxu0 %v447
  %v664 = vpop.f32.mrf.mxu0
  %v665 = vadd.f32 %v359, %v664
  %v666 = vpop.f32.mrf.mxu0
  %667 = vmatprep.mubr.f32.mxu0 0.0
  %668 = vmatmul.mubr.f32.gmra.mxu0 %v450
  %v669 = vpop.f32.mrf.mxu0
  %v670 = vadd.f32 %v359, %v669
  %v671 = vpop.f32.mrf.mxu0
  %672 = vmatprep.mubr.f32.mxu0 0.0
  %673 = vmatmul.mubr.f32.gmra.mxu0 %v453
  %v674 = vpop.f32.mrf.mxu0
  %v675 = vadd.f32 %v359, %v674
  %v676 = vpop.f32.mrf.mxu0
  %677 = vmatprep.mubr.f32.mxu0 0.0
  %678 = vmatmul.mubr.f32.gmra.mxu0 %v456
  %v679 = vpop.f32.mrf.mxu0
  %v680 = vadd.f32 %v359, %v679
  %v681 = vpop.f32.mrf.mxu0
  %682 = vdwg.mxu0
  %v683 = vmax.f32 %v525, 0.0
  %v684 = vmax.f32 %v530, 0.0
  %v685 = vmax.f32 %v535, 0.0
  %v686 = vmax.f32 %v540, 0.0
  %v687 = vmax.f32 %v545, 0.0
  %v688 = vmax.f32 %v550, 0.0
  %v689 = vmax.f32 %v555, 0.0
  %v690 = vmax.f32 %v560, 0.0
  %v691 = vmax.f32 %v565, 0.0
  %v692 = vmax.f32 %v570, 0.0
  %v693 = vmax.f32 %v575, 0.0
  %v694 = vmax.f32 %v580, 0.0
  %v695 = vmax.f32 %v585, 0.0
  %v696 = vmax.f32 %v590, 0.0
  %v697 = vmax.f32 %v595, 0.0
  %v698 = vmax.f32 %v600, 0.0
  %v699 = vmax.f32 %v605, 0.0
  %v700 = vmax.f32 %v610, 0.0
  %v701 = vmax.f32 %v615, 0.0
  %v702 = vmax.f32 %v620, 0.0
  %v703 = vmax.f32 %v625, 0.0
  %v704 = vmax.f32 %v630, 0.0
  %v705 = vmax.f32 %v635, 0.0
  %v706 = vmax.f32 %v640, 0.0
  %v707 = vmax.f32 %v645, 0.0
  %v708 = vmax.f32 %v650, 0.0
  %v709 = vmax.f32 %v655, 0.0
  %v710 = vmax.f32 %v660, 0.0
  %v711 = vmax.f32 %v665, 0.0
  %v712 = vmax.f32 %v670, 0.0
  %v713 = vmax.f32 %v675, 0.0
  %v714 = vmax.f32 %v680, 0.0
  %v715 = vld [vmem:[%s5] sm:$0xff]
  %v716 = vld [vmem:[%s5 + $0x8] sm:$0xff]
  %v717 = vld [vmem:[%s5 + $0x10] sm:$0xff]
  %v718 = vld [vmem:[%s5 + $0x18] sm:$0xff]
  %v719 = vld [vmem:[%s6] sm:$0x1]
  %v721 = vlaneseq
  %v722 = vshrl.u32 %v721, 7
  %v723 = vsub.s32 0, %v722
  %v724 = vrot.slane %v719, %v723
  %vm726 = vcmask 261120
  %v728 = vsel %vm726, %v683, 0
  %v731 = vsel %vm726, %v684, 0
  %v734 = vsel %vm726, %v685, 0
  %v737 = vsel %vm726, %v686, 0
  %v740 = vsel %vm726, %v687, 0
  %v743 = vsel %vm726, %v688, 0
  %v746 = vsel %vm726, %v689, 0
  %v749 = vsel %vm726, %v690, 0
  %v752 = vsel %vm726, %v691, 0
  %v755 = vsel %vm726, %v692, 0
  %v758 = vsel %vm726, %v693, 0
  %v761 = vsel %vm726, %v694, 0
  %v764 = vsel %vm726, %v695, 0
  %v767 = vsel %vm726, %v696, 0
  %v770 = vsel %vm726, %v697, 0
  %v773 = vsel %vm726, %v698, 0
  %v776 = vsel %vm726, %v699, 0
  %v779 = vsel %vm726, %v700, 0
  %v782 = vsel %vm726, %v701, 0
  %v785 = vsel %vm726, %v702, 0
  %v788 = vsel %vm726, %v703, 0
  %v791 = vsel %vm726, %v704, 0
  %v794 = vsel %vm726, %v705, 0
  %v797 = vsel %vm726, %v706, 0
  %v800 = vsel %vm726, %v707, 0
  %v803 = vsel %vm726, %v708, 0
  %v806 = vsel %vm726, %v709, 0
  %v809 = vsel %vm726, %v710, 0
  %v812 = vsel %vm726, %v711, 0
  %v815 = vsel %vm726, %v712, 0
  %v818 = vsel %vm726, %v713, 0
  %v821 = vsel %vm726, %v714, 0
  %823 = vmatprep.subr.mxu0 0.0
  %824 = vmatpush1.msra.mxu0 0.0
  %825 = vmatprep.subr.mxu0 0.0
  %826 = vmatpush1.msra.mxu0 0.0
  %827 = vmatprep.subr.mxu0 0.0
  %828 = vmatpush1.msra.mxu0 0.0
  %829 = vmatprep.subr.mxu0 0.0
  %830 = vmatpush1.msra.mxu0 0.0
  %831 = vmatprep.subr.mxu0 0.0
  %832 = vmatpush1.msra.mxu0 0.0
  %833 = vmatprep.subr.mxu0 0.0
  %834 = vmatpush1.msra.mxu0 0.0
  %835 = vmatprep.subr.mxu0 0.0
  %836 = vmatpush1.msra.mxu0 0.0
  %837 = vmatprep.subr.mxu0 0.0
  %838 = vmatpush1.msra.mxu0 0.0
  %839 = vmatprep.subr.mxu0 0.0
  %840 = vmatpush1.msra.mxu0 0.0
  %841 = vmatprep.subr.mxu0 0.0
  %842 = vmatpush1.msra.mxu0 0.0
  %843 = vmatprep.subr.mxu0 0.0
  %844 = vmatpush1.msra.mxu0 0.0
  %845 = vmatprep.subr.mxu0 0.0
  %846 = vmatpush1.msra.mxu0 0.0
  %847 = vmatprep.subr.mxu0 0.0
  %848 = vmatpush1.msra.mxu0 %v718
  %849 = vmatprep.subr.mxu0 0.0
  %850 = vmatpush1.msra.mxu0 %v717
  %851 = vmatprep.subr.mxu0 0.0
  %852 = vmatpush1.msra.mxu0 %v716
  %853 = vmatprep.subr.mxu0 0.0
  %854 = vmatpush1.msra.mxu0 %v715
  %855 = vmatprep.subr.mxu0 0.0
  %856 = vmatpush2.msra.mxu0 0.0
  %857 = vmatprep.subr.mxu0 0.0
  %858 = vmatpush2.msra.mxu0 0.0
  %859 = vmatprep.subr.mxu0 0.0
  %860 = vmatpush2.msra.mxu0 0.0
  %861 = vmatprep.subr.mxu0 0.0
  %862 = vmatpush2.msra.mxu0 0.0
  %863 = vmatprep.subr.mxu0 0.0
  %864 = vmatpush2.msra.mxu0 0.0
  %865 = vmatprep.subr.mxu0 0.0
  %866 = vmatpush2.msra.mxu0 0.0
  %867 = vmatprep.subr.mxu0 0.0
  %868 = vmatpush2.msra.mxu0 0.0
  %869 = vmatprep.subr.mxu0 0.0
  %870 = vmatpush2.msra.mxu0 0.0
  %871 = vmatprep.subr.mxu0 0.0
  %872 = vmatpush2.msra.mxu0 0.0
  %873 = vmatprep.subr.mxu0 0.0
  %874 = vmatpush2.msra.mxu0 0.0
  %875 = vmatprep.subr.mxu0 0.0
  %876 = vmatpush2.msra.mxu0 0.0
  %877 = vmatprep.subr.mxu0 0.0
  %878 = vmatpush2.msra.mxu0 0.0
  %879 = vmatprep.subr.mxu0 0.0
  %880 = vmatpush2.msra.mxu0 0.0
  %881 = vmatprep.subr.mxu0 0.0
  %882 = vmatpush2.msra.mxu0 0.0
  %883 = vmatprep.subr.mxu0 0.0
  %884 = vmatpush2.msra.mxu0 0.0
  %885 = vmatprep.subr.mxu0 0.0
  %886 = vmatpush2.msra.mxu0 0.0
  %887 = vmatprep.mubr.f32.mxu0 0.0
  %888 = vmatmul.mubr.f32.gmra.mxu0 %v728
  %v889 = vpop.f32.mrf.mxu0
  %v890 = vadd.f32 %v724, %v889
  %v891 = vpop.f32.mrf.mxu0
  %892 = vmatprep.mubr.f32.mxu0 0.0
  %893 = vmatmul.mubr.f32.gmra.mxu0 %v731
  %v894 = vpop.f32.mrf.mxu0
  %v895 = vadd.f32 %v724, %v894
  %v896 = vpop.f32.mrf.mxu0
  %897 = vmatprep.mubr.f32.mxu0 0.0
  %898 = vmatmul.mubr.f32.gmra.mxu0 %v734
  %v899 = vpop.f32.mrf.mxu0
  %v900 = vadd.f32 %v724, %v899
  %v901 = vpop.f32.mrf.mxu0
  %902 = vmatprep.mubr.f32.mxu0 0.0
  %903 = vmatmul.mubr.f32.gmra.mxu0 %v737
  %v904 = vpop.f32.mrf.mxu0
  %v905 = vadd.f32 %v724, %v904
  %v906 = vpop.f32.mrf.mxu0
  %907 = vmatprep.mubr.f32.mxu0 0.0
  %908 = vmatmul.mubr.f32.gmra.mxu0 %v740
  %v909 = vpop.f32.mrf.mxu0
  %v910 = vadd.f32 %v724, %v909
  %v911 = vpop.f32.mrf.mxu0
  %912 = vmatprep.mubr.f32.mxu0 0.0
  %913 = vmatmul.mubr.f32.gmra.mxu0 %v743
  %v914 = vpop.f32.mrf.mxu0
  %v915 = vadd.f32 %v724, %v914
  %v916 = vpop.f32.mrf.mxu0
  %917 = vmatprep.mubr.f32.mxu0 0.0
  %918 = vmatmul.mubr.f32.gmra.mxu0 %v746
  %v919 = vpop.f32.mrf.mxu0
  %v920 = vadd.f32 %v724, %v919
  %v921 = vpop.f32.mrf.mxu0
  %922 = vmatprep.mubr.f32.mxu0 0.0
  %923 = vmatmul.mubr.f32.gmra.mxu0 %v749
  %v924 = vpop.f32.mrf.mxu0
  %v925 = vadd.f32 %v724, %v924
  %v926 = vpop.f32.mrf.mxu0
  %927 = vmatprep.mubr.f32.mxu0 0.0
  %928 = vmatmul.mubr.f32.gmra.mxu0 %v752
  %v929 = vpop.f32.mrf.mxu0
  %v930 = vadd.f32 %v724, %v929
  %v931 = vpop.f32.mrf.mxu0
  %932 = vmatprep.mubr.f32.mxu0 0.0
  %933 = vmatmul.mubr.f32.gmra.mxu0 %v755
  %v934 = vpop.f32.mrf.mxu0
  %v935 = vadd.f32 %v724, %v934
  %v936 = vpop.f32.mrf.mxu0
  %937 = vmatprep.mubr.f32.mxu0 0.0
  %938 = vmatmul.mubr.f32.gmra.mxu0 %v758
  %v939 = vpop.f32.mrf.mxu0
  %v940 = vadd.f32 %v724, %v939
  %v941 = vpop.f32.mrf.mxu0
  %942 = vmatprep.mubr.f32.mxu0 0.0
  %943 = vmatmul.mubr.f32.gmra.mxu0 %v761
  %v944 = vpop.f32.mrf.mxu0
  %v945 = vadd.f32 %v724, %v944
  %v946 = vpop.f32.mrf.mxu0
  %947 = vmatprep.mubr.f32.mxu0 0.0
  %948 = vmatmul.mubr.f32.gmra.mxu0 %v764
  %v949 = vpop.f32.mrf.mxu0
  %v950 = vadd.f32 %v724, %v949
  %v951 = vpop.f32.mrf.mxu0
  %952 = vmatprep.mubr.f32.mxu0 0.0
  %953 = vmatmul.mubr.f32.gmra.mxu0 %v767
  %v954 = vpop.f32.mrf.mxu0
  %v955 = vadd.f32 %v724, %v954
  %v956 = vpop.f32.mrf.mxu0
  %957 = vmatprep.mubr.f32.mxu0 0.0
  %958 = vmatmul.mubr.f32.gmra.mxu0 %v770
  %v959 = vpop.f32.mrf.mxu0
  %v960 = vadd.f32 %v724, %v959
  %v961 = vpop.f32.mrf.mxu0
  %962 = vmatprep.mubr.f32.mxu0 0.0
  %963 = vmatmul.mubr.f32.gmra.mxu0 %v773
  %v964 = vpop.f32.mrf.mxu0
  %v965 = vadd.f32 %v724, %v964
  %v966 = vpop.f32.mrf.mxu0
  %967 = vmatprep.mubr.f32.mxu0 0.0
  %968 = vmatmul.mubr.f32.gmra.mxu0 %v776
  %v969 = vpop.f32.mrf.mxu0
  %v970 = vadd.f32 %v724, %v969
  %v971 = vpop.f32.mrf.mxu0
  %972 = vmatprep.mubr.f32.mxu0 0.0
  %973 = vmatmul.mubr.f32.gmra.mxu0 %v779
  %v974 = vpop.f32.mrf.mxu0
  %v975 = vadd.f32 %v724, %v974
  %v976 = vpop.f32.mrf.mxu0
  %977 = vmatprep.mubr.f32.mxu0 0.0
  %978 = vmatmul.mubr.f32.gmra.mxu0 %v782
  %v979 = vpop.f32.mrf.mxu0
  %v980 = vadd.f32 %v724, %v979
  %v981 = vpop.f32.mrf.mxu0
  %982 = vmatprep.mubr.f32.mxu0 0.0
  %983 = vmatmul.mubr.f32.gmra.mxu0 %v785
  %v984 = vpop.f32.mrf.mxu0
  %v985 = vadd.f32 %v724, %v984
  %v986 = vpop.f32.mrf.mxu0
  %987 = vmatprep.mubr.f32.mxu0 0.0
  %988 = vmatmul.mubr.f32.gmra.mxu0 %v788
  %v989 = vpop.f32.mrf.mxu0
  %v990 = vadd.f32 %v724, %v989
  %v991 = vpop.f32.mrf.mxu0
  %992 = vmatprep.mubr.f32.mxu0 0.0
  %993 = vmatmul.mubr.f32.gmra.mxu0 %v791
  %v994 = vpop.f32.mrf.mxu0
  %v995 = vadd.f32 %v724, %v994
  %v996 = vpop.f32.mrf.mxu0
  %997 = vmatprep.mubr.f32.mxu0 0.0
  %998 = vmatmul.mubr.f32.gmra.mxu0 %v794
  %v999 = vpop.f32.mrf.mxu0
  %v1000 = vadd.f32 %v724, %v999
  %v1001 = vpop.f32.mrf.mxu0
  %1002 = vmatprep.mubr.f32.mxu0 0.0
  %1003 = vmatmul.mubr.f32.gmra.mxu0 %v797
  %v1004 = vpop.f32.mrf.mxu0
  %v1005 = vadd.f32 %v724, %v1004
  %v1006 = vpop.f32.mrf.mxu0
  %1007 = vmatprep.mubr.f32.mxu0 0.0
  %1008 = vmatmul.mubr.f32.gmra.mxu0 %v800
  %v1009 = vpop.f32.mrf.mxu0
  %v1010 = vadd.f32 %v724, %v1009
  %v1011 = vpop.f32.mrf.mxu0
  %1012 = vmatprep.mubr.f32.mxu0 0.0
  %1013 = vmatmul.mubr.f32.gmra.mxu0 %v803
  %v1014 = vpop.f32.mrf.mxu0
  %v1015 = vadd.f32 %v724, %v1014
  %v1016 = vpop.f32.mrf.mxu0
  %1017 = vmatprep.mubr.f32.mxu0 0.0
  %1018 = vmatmul.mubr.f32.gmra.mxu0 %v806
  %v1019 = vpop.f32.mrf.mxu0
  %v1020 = vadd.f32 %v724, %v1019
  %v1021 = vpop.f32.mrf.mxu0
  %1022 = vmatprep.mubr.f32.mxu0 0.0
  %1023 = vmatmul.mubr.f32.gmra.mxu0 %v809
  %v1024 = vpop.f32.mrf.mxu0
  %v1025 = vadd.f32 %v724, %v1024
  %v1026 = vpop.f32.mrf.mxu0
  %1027 = vmatprep.mubr.f32.mxu0 0.0
  %1028 = vmatmul.mubr.f32.gmra.mxu0 %v812
  %v1029 = vpop.f32.mrf.mxu0
  %v1030 = vadd.f32 %v724, %v1029
  %v1031 = vpop.f32.mrf.mxu0
  %1032 = vmatprep.mubr.f32.mxu0 0.0
  %1033 = vmatmul.mubr.f32.gmra.mxu0 %v815
  %v1034 = vpop.f32.mrf.mxu0
  %v1035 = vadd.f32 %v724, %v1034
  %v1036 = vpop.f32.mrf.mxu0
  %1037 = vmatprep.mubr.f32.mxu0 0.0
  %1038 = vmatmul.mubr.f32.gmra.mxu0 %v818
  %v1039 = vpop.f32.mrf.mxu0
  %v1040 = vadd.f32 %v724, %v1039
  %v1041 = vpop.f32.mrf.mxu0
  %1042 = vmatprep.mubr.f32.mxu0 0.0
  %1043 = vmatmul.mubr.f32.gmra.mxu0 %v821
  %v1044 = vpop.f32.mrf.mxu0
  %v1045 = vadd.f32 %v724, %v1044
  %v1046 = vpop.f32.mrf.mxu0
  %1047 = vdwg.mxu0
  %v1048 = vmax.f32 %v890, 0.0
  %v1049 = vmax.f32 %v895, 0.0
  %v1050 = vmax.f32 %v900, 0.0
  %v1051 = vmax.f32 %v905, 0.0
  %v1052 = vmax.f32 %v910, 0.0
  %v1053 = vmax.f32 %v915, 0.0
  %v1054 = vmax.f32 %v920, 0.0
  %v1055 = vmax.f32 %v925, 0.0
  %v1056 = vmax.f32 %v930, 0.0
  %v1057 = vmax.f32 %v935, 0.0
  %v1058 = vmax.f32 %v940, 0.0
  %v1059 = vmax.f32 %v945, 0.0
  %v1060 = vmax.f32 %v950, 0.0
  %v1061 = vmax.f32 %v955, 0.0
  %v1062 = vmax.f32 %v960, 0.0
  %v1063 = vmax.f32 %v965, 0.0
  %v1064 = vmax.f32 %v970, 0.0
  %v1065 = vmax.f32 %v975, 0.0
  %v1066 = vmax.f32 %v980, 0.0
  %v1067 = vmax.f32 %v985, 0.0
  %v1068 = vmax.f32 %v990, 0.0
  %v1069 = vmax.f32 %v995, 0.0
  %v1070 = vmax.f32 %v1000, 0.0
  %v1071 = vmax.f32 %v1005, 0.0
  %v1072 = vmax.f32 %v1010, 0.0
  %v1073 = vmax.f32 %v1015, 0.0
  %v1074 = vmax.f32 %v1020, 0.0
  %v1075 = vmax.f32 %v1025, 0.0
  %v1076 = vmax.f32 %v1030, 0.0
  %v1077 = vmax.f32 %v1035, 0.0
  %v1078 = vmax.f32 %v1040, 0.0
  %v1079 = vmax.f32 %v1045, 0.0
  %v1080 = vld [vmem:[%s7] sm:$0x1]
  %v1082 = vlaneseq
  %v1083 = vshrl.u32 %v1082, 7
  %v1084 = vsub.s32 0, %v1083
  %v1085 = vrot.slane %v1080, %v1084
  %v1087 = vmul.f32 %v1048, %v1085
  %v1088 = vmul.f32 %v1049, %v1085
  %v1089 = vmul.f32 %v1050, %v1085
  %v1090 = vmul.f32 %v1051, %v1085
  %v1091 = vmul.f32 %v1052, %v1085
  %v1092 = vmul.f32 %v1053, %v1085
  %v1093 = vmul.f32 %v1054, %v1085
  %v1094 = vmul.f32 %v1055, %v1085
  %v1095 = vmul.f32 %v1056, %v1085
  %v1096 = vmul.f32 %v1057, %v1085
  %v1097 = vmul.f32 %v1058, %v1085
  %v1098 = vmul.f32 %v1059, %v1085
  %v1099 = vmul.f32 %v1060, %v1085
  %v1100 = vmul.f32 %v1061, %v1085
  %v1101 = vmul.f32 %v1062, %v1085
  %v1102 = vmul.f32 %v1063, %v1085
  %v1103 = vmul.f32 %v1064, %v1085
  %v1104 = vmul.f32 %v1065, %v1085
  %v1105 = vmul.f32 %v1066, %v1085
  %v1106 = vmul.f32 %v1067, %v1085
  %v1107 = vmul.f32 %v1068, %v1085
  %v1108 = vmul.f32 %v1069, %v1085
  %v1109 = vmul.f32 %v1070, %v1085
  %v1110 = vmul.f32 %v1071, %v1085
  %v1111 = vmul.f32 %v1072, %v1085
  %v1112 = vmul.f32 %v1073, %v1085
  %v1113 = vmul.f32 %v1074, %v1085
  %v1114 = vmul.f32 %v1075, %v1085
  %v1115 = vmul.f32 %v1076, %v1085
  %v1116 = vmul.f32 %v1077, %v1085
  %v1117 = vmul.f32 %v1078, %v1085
  %v1118 = vmul.f32 %v1079, %v1085
  %vm1119 = vcmask 130048
  %v1120 = vsel %vm1119, %v1087, 0.0
  %1121 = vadd.xlane.f32.xlu0 %v1120
  %v1122 = vpop.xlane.xlu0 %1121
  %v1123 = vsel %vm1119, %v1088, 0.0
  %1124 = vadd.xlane.f32.xlu0 %v1123
  %v1125 = vpop.xlane.xlu0 %1124
  %v1126 = vsel %vm1119, %v1089, 0.0
  %1127 = vadd.xlane.f32.xlu0 %v1126
  %v1128 = vpop.xlane.xlu0 %1127
  %v1129 = vsel %vm1119, %v1090, 0.0
  %1130 = vadd.xlane.f32.xlu0 %v1129
  %v1131 = vpop.xlane.xlu0 %1130
  %v1132 = vsel %vm1119, %v1091, 0.0
  %1133 = vadd.xlane.f32.xlu0 %v1132
  %v1134 = vpop.xlane.xlu0 %1133
  %v1135 = vsel %vm1119, %v1092, 0.0
  %1136 = vadd.xlane.f32.xlu0 %v1135
  %v1137 = vpop.xlane.xlu0 %1136
  %v1138 = vsel %vm1119, %v1093, 0.0
  %1139 = vadd.xlane.f32.xlu0 %v1138
  %v1140 = vpop.xlane.xlu0 %1139
  %v1141 = vsel %vm1119, %v1094, 0.0
  %1142 = vadd.xlane.f32.xlu0 %v1141
  %v1143 = vpop.xlane.xlu0 %1142
  %v1144 = vsel %vm1119, %v1095, 0.0
  %1145 = vadd.xlane.f32.xlu0 %v1144
  %v1146 = vpop.xlane.xlu0 %1145
  %v1147 = vsel %vm1119, %v1096, 0.0
  %1148 = vadd.xlane.f32.xlu0 %v1147
  %v1149 = vpop.xlane.xlu0 %1148
  %v1150 = vsel %vm1119, %v1097, 0.0
  %1151 = vadd.xlane.f32.xlu0 %v1150
  %v1152 = vpop.xlane.xlu0 %1151
  %v1153 = vsel %vm1119, %v1098, 0.0
  %1154 = vadd.xlane.f32.xlu0 %v1153
  %v1155 = vpop.xlane.xlu0 %1154
  %v1156 = vsel %vm1119, %v1099, 0.0
  %1157 = vadd.xlane.f32.xlu0 %v1156
  %v1158 = vpop.xlane.xlu0 %1157
  %v1159 = vsel %vm1119, %v1100, 0.0
  %1160 = vadd.xlane.f32.xlu0 %v1159
  %v1161 = vpop.xlane.xlu0 %1160
  %v1162 = vsel %vm1119, %v1101, 0.0
  %1163 = vadd.xlane.f32.xlu0 %v1162
  %v1164 = vpop.xlane.xlu0 %1163
  %v1165 = vsel %vm1119, %v1102, 0.0
  %1166 = vadd.xlane.f32.xlu0 %v1165
  %v1167 = vpop.xlane.xlu0 %1166
  %v1168 = vsel %vm1119, %v1103, 0.0
  %1169 = vadd.xlane.f32.xlu0 %v1168
  %v1170 = vpop.xlane.xlu0 %1169
  %v1171 = vsel %vm1119, %v1104, 0.0
  %1172 = vadd.xlane.f32.xlu0 %v1171
  %v1173 = vpop.xlane.xlu0 %1172
  %v1174 = vsel %vm1119, %v1105, 0.0
  %1175 = vadd.xlane.f32.xlu0 %v1174
  %v1176 = vpop.xlane.xlu0 %1175
  %v1177 = vsel %vm1119, %v1106, 0.0
  %1178 = vadd.xlane.f32.xlu0 %v1177
  %v1179 = vpop.xlane.xlu0 %1178
  %v1180 = vsel %vm1119, %v1107, 0.0
  %1181 = vadd.xlane.f32.xlu0 %v1180
  %v1182 = vpop.xlane.xlu0 %1181
  %v1183 = vsel %vm1119, %v1108, 0.0
  %1184 = vadd.xlane.f32.xlu0 %v1183
  %v1185 = vpop.xlane.xlu0 %1184
  %v1186 = vsel %vm1119, %v1109, 0.0
  %1187 = vadd.xlane.f32.xlu0 %v1186
  %v1188 = vpop.xlane.xlu0 %1187
  %v1189 = vsel %vm1119, %v1110, 0.0
  %1190 = vadd.xlane.f32.xlu0 %v1189
  %v1191 = vpop.xlane.xlu0 %1190
  %v1192 = vsel %vm1119, %v1111, 0.0
  %1193 = vadd.xlane.f32.xlu0 %v1192
  %v1194 = vpop.xlane.xlu0 %1193
  %v1195 = vsel %vm1119, %v1112, 0.0
  %1196 = vadd.xlane.f32.xlu0 %v1195
  %v1197 = vpop.xlane.xlu0 %1196
  %v1198 = vsel %vm1119, %v1113, 0.0
  %1199 = vadd.xlane.f32.xlu0 %v1198
  %v1200 = vpop.xlane.xlu0 %1199
  %v1201 = vsel %vm1119, %v1114, 0.0
  %1202 = vadd.xlane.f32.xlu0 %v1201
  %v1203 = vpop.xlane.xlu0 %1202
  %v1204 = vsel %vm1119, %v1115, 0.0
  %1205 = vadd.xlane.f32.xlu0 %v1204
  %v1206 = vpop.xlane.xlu0 %1205
  %v1207 = vsel %vm1119, %v1116, 0.0
  %1208 = vadd.xlane.f32.xlu0 %v1207
  %v1209 = vpop.xlane.xlu0 %1208
  %v1210 = vsel %vm1119, %v1117, 0.0
  %1211 = vadd.xlane.f32.xlu0 %v1210
  %v1212 = vpop.xlane.xlu0 %1211
  %v1213 = vsel %vm1119, %v1118, 0.0
  %1214 = vadd.xlane.f32.xlu0 %v1213
  %v1215 = vpop.xlane.xlu0 %1214
  %v1216 = vld [vmem:[#allocation2] sm:$0x1]
  %v1218 = vlaneseq
  %v1219 = vshrl.u32 %v1218, 7
  %v1220 = vsub.s32 0, %v1219
  %v1221 = vrot.slane %v1216, %v1220
  %v1223 = vadd.f32 %v1122, %v1221
  %v1224 = vadd.f32 %v1125, %v1221
  %v1225 = vadd.f32 %v1128, %v1221
  %v1226 = vadd.f32 %v1131, %v1221
  %v1227 = vadd.f32 %v1134, %v1221
  %v1228 = vadd.f32 %v1137, %v1221
  %v1229 = vadd.f32 %v1140, %v1221
  %v1230 = vadd.f32 %v1143, %v1221
  %v1231 = vadd.f32 %v1146, %v1221
  %v1232 = vadd.f32 %v1149, %v1221
  %v1233 = vadd.f32 %v1152, %v1221
  %v1234 = vadd.f32 %v1155, %v1221
  %v1235 = vadd.f32 %v1158, %v1221
  %v1236 = vadd.f32 %v1161, %v1221
  %v1237 = vadd.f32 %v1164, %v1221
  %v1238 = vadd.f32 %v1167, %v1221
  %v1239 = vadd.f32 %v1170, %v1221
  %v1240 = vadd.f32 %v1173, %v1221
  %v1241 = vadd.f32 %v1176, %v1221
  %v1242 = vadd.f32 %v1179, %v1221
  %v1243 = vadd.f32 %v1182, %v1221
  %v1244 = vadd.f32 %v1185, %v1221
  %v1245 = vadd.f32 %v1188, %v1221
  %v1246 = vadd.f32 %v1191, %v1221
  %v1247 = vadd.f32 %v1194, %v1221
  %v1248 = vadd.f32 %v1197, %v1221
  %v1249 = vadd.f32 %v1200, %v1221
  %v1250 = vadd.f32 %v1203, %v1221
  %v1251 = vadd.f32 %v1206, %v1221
  %v1252 = vadd.f32 %v1209, %v1221
  %v1253 = vadd.f32 %v1212, %v1221
  %v1254 = vadd.f32 %v1215, %v1221
  %vm1255 = vcmask 7168
  %1256 = vst.msk [vmem:[%s9] sm:$0xff] %vm1255, %v1223
  %1257 = vst.msk [vmem:[%s9 + $0x8] sm:$0xff] %vm1255, %v1224
  %1258 = vst.msk [vmem:[%s9 + $0x10] sm:$0xff] %vm1255, %v1225
  %1259 = vst.msk [vmem:[%s9 + $0x18] sm:$0xff] %vm1255, %v1226
  %1260 = vst.msk [vmem:[%s9 + $0x20] sm:$0xff] %vm1255, %v1227
  %1261 = vst.msk [vmem:[%s9 + $0x28] sm:$0xff] %vm1255, %v1228
  %1262 = vst.msk [vmem:[%s9 + $0x30] sm:$0xff] %vm1255, %v1229
  %1263 = vst.msk [vmem:[%s9 + $0x38] sm:$0xff] %vm1255, %v1230
  %1264 = vst.msk [vmem:[%s9 + $0x40] sm:$0xff] %vm1255, %v1231
  %1265 = vst.msk [vmem:[%s9 + $0x48] sm:$0xff] %vm1255, %v1232
  %1266 = vst.msk [vmem:[%s9 + $0x50] sm:$0xff] %vm1255, %v1233
  %1267 = vst.msk [vmem:[%s9 + $0x58] sm:$0xff] %vm1255, %v1234
  %1268 = vst.msk [vmem:[%s9 + $0x60] sm:$0xff] %vm1255, %v1235
  %1269 = vst.msk [vmem:[%s9 + $0x68] sm:$0xff] %vm1255, %v1236
  %1270 = vst.msk [vmem:[%s9 + $0x70] sm:$0xff] %vm1255, %v1237
  %1271 = vst.msk [vmem:[%s9 + $0x78] sm:$0xff] %vm1255, %v1238
  %1272 = vst.msk [vmem:[%s9 + $0x80] sm:$0xff] %vm1255, %v1239
  %1273 = vst.msk [vmem:[%s9 + $0x88] sm:$0xff] %vm1255, %v1240
  %1274 = vst.msk [vmem:[%s9 + $0x90] sm:$0xff] %vm1255, %v1241
  %1275 = vst.msk [vmem:[%s9 + $0x98] sm:$0xff] %vm1255, %v1242
  %1276 = vst.msk [vmem:[%s9 + $0xa0] sm:$0xff] %vm1255, %v1243
  %1277 = vst.msk [vmem:[%s9 + $0xa8] sm:$0xff] %vm1255, %v1244
  %1278 = vst.msk [vmem:[%s9 + $0xb0] sm:$0xff] %vm1255, %v1245
  %1279 = vst.msk [vmem:[%s9 + $0xb8] sm:$0xff] %vm1255, %v1246
  %1280 = vst.msk [vmem:[%s9 + $0xc0] sm:$0xff] %vm1255, %v1247
  %1281 = vst.msk [vmem:[%s9 + $0xc8] sm:$0xff] %vm1255, %v1248
  %1282 = vst.msk [vmem:[%s9 + $0xd0] sm:$0xff] %vm1255, %v1249
  %1283 = vst.msk [vmem:[%s9 + $0xd8] sm:$0xff] %vm1255, %v1250
  %1284 = vst.msk [vmem:[%s9 + $0xe0] sm:$0xff] %vm1255, %v1251
  %1285 = vst.msk [vmem:[%s9 + $0xe8] sm:$0xff] %vm1255, %v1252
  %1286 = vst.msk [vmem:[%s9 + $0xf0] sm:$0xff] %vm1255, %v1253
  %1287 = vst.msk [vmem:[%s9 + $0xf8] sm:$0xff] %vm1255, %v1254
  // Predicated region
  $region38: #{tpu_custom_call.1} parent=0 // pred_check
    _
  $region39: #{tpu_custom_call.1} parent=0 // pred_check_branch
    %1289 = sbr.rel (0) target = $region41
  $region40: #{tpu_custom_call.1} parent=0 // pred_region
    _
  $region41: #{tpu_custom_call.1} parent=0 // pred_fallthru
    _
  // Predicated region
  $region42: #{tpu_custom_call.1} parent=0 // pred_check
    _
  $region43: #{tpu_custom_call.1} parent=0 // pred_check_branch
    %1291 = sbr.rel (0) target = $region45
  $region44: #{tpu_custom_call.1} parent=0 // pred_region
    _
  $region45: #{tpu_custom_call.1} parent=0 // pred_fallthru
    _

</llo_original>
